<compile_context>
chip_gen: v6e
topology: v6e:2x2x1
jax: 0.10.0
libtpu: 0.0.40
codegen_flags: <defaults>
</compile_context>

<pallas_src>
import jax
import jax.numpy as jnp
from jax.experimental import pallas as pl
from jax.experimental.pallas import tpu as pltpu


def _round_up(n, m):
    return ((n + m - 1) // m) * m


def _vmem_capacity_bytes():
    """Physical per-core VMEM (trace-time query); conservative fallback."""
    try:
        return int(pltpu.get_tpu_info().vmem_capacity_bytes)
    except Exception:
        return 64 * 2**20  # v7x-class per-TensorCore VMEM (safe everywhere)


# ---------------------------------------------------------------------------
# Parameter packing: all 76 weight/bias scalars live in one (8, 128) f32 block
# (exactly one vreg) so the kernel needs a single resident VMEM buffer + DMA
# instead of six tiny, individually double-buffered blocks.
#   rows 0-4, cols  0- 8 : w1 (5, 9)      rows 0-4, col 16 : b1 (5,)
#   rows 0-2, cols 32-36 : w2 (3, 5)      rows 0-2, col 48 : b2 (3,)
#   rows 0-1, cols 64-66 : w3 (2, 3)      rows 0-1, col 80 : b3 (2,)
# ---------------------------------------------------------------------------
def pack_params(params):
    w1, b1, w2, b2, w3, b3 = [p.astype(jnp.float32) for p in params]
    blk = jnp.zeros((8, 128), jnp.float32)
    blk = blk.at[0:5, 0:9].set(w1)
    blk = blk.at[0:5, 16].set(b1)
    blk = blk.at[0:3, 32:37].set(w2)
    blk = blk.at[0:3, 48].set(b2)
    blk = blk.at[0:2, 64:67].set(w3)
    blk = blk.at[0:2, 80].set(b3)
    return blk


def classifier_kernel(x_ref, p_ref, o_ref):
    """One batch tile; the batch sits on the LANE axis inside the kernel.

    x_ref : (tb, 9)   input rows as stored in HBM (batch on sublanes)
    p_ref : (8, 128)  packed weights/biases, resident in VMEM
    o_ref : (2, tb)   log-probs, lane-dense store (classes on sublanes)
    """
    P = p_ref[...]
    w1, b1 = P[0:5, 0:9], P[0:5, 16:17]
    w2, b2 = P[0:3, 32:37], P[0:3, 48:49]
    w3, b3 = P[0:2, 64:67], P[0:2, 80:81]

    # fc1 + ReLU: contract w1's 9-dim against x's 9-dim (its lane axis), i.e.
    # w1 @ x^T -> (5, tb).  This moves the batch onto the lane axis so every
    # downstream VPU/EUP op and the final store are lane-dense.
    # (Identical contraction to pl.dot(w1, x, trans_b=True).  If a bundle dump
    #  shows Mosaic materializing an x^T relayout here, the real fix is a
    #  feature-major (9, tb) input layout from the producer -- see wrapper.)
    h1 = jax.lax.dot_general(
        w1, x_ref[...],
        dimension_numbers=(((1,), (1,)), ((), ())),
        preferred_element_type=jnp.float32,
    ) + b1
    h1 = jnp.maximum(h1, 0.0)

    # fc2 + tanh: (3, 5) @ (5, tb) -> (3, tb)
    h2 = jnp.tanh(jnp.dot(w2, h1, preferred_element_type=jnp.float32) + b2)

    # fc3: (2, 3) @ (3, tb) -> (2, tb)
    logits = jnp.dot(w3, h2, preferred_element_type=jnp.float32) + b3

    # 2-class log_softmax in closed form (exact, numerically stable):
    #   lse = max(z0, z1) + log(1 + exp(-|z0 - z1|))
    # -> one exp + one log per row instead of max/exp/exp/sum/log.
    z0, z1 = logits[0:1, :], logits[1:2, :]
    lse = jnp.maximum(z0, z1) + jnp.log(1.0 + jnp.exp(-jnp.abs(z0 - z1)))
    o_ref[...] = logits - lse


def classifier_forward(x, params, *, class_major=False, tile_max=None):
    """Forward pass of `Classifier`.

    x      : (B, ...) flattening to (B, 9) -- like x.view(B, -1) in the module.
    params : (w1, b1, w2, b2, w3, b3) in PyTorch nn.Linear (out, in) layout.
    Returns (B, 2) log-probs; with class_major=True returns (2, B) and skips
    the wrapper transpose pass (for consumers that take class-major data).
    """
    B = x.shape[0]
    x2d = x.reshape(B, -1)
    assert x2d.shape[1] == 9, "Classifier expects 9 input features after flatten"
    if x2d.dtype != jnp.float32:
        x2d = x2d.astype(jnp.float32)
    # TODO(synk): if the upstream producer can emit x feature-major (9, B)
    # and/or in bfloat16, stream that layout/dtype directly (native (5,9)x(9,tb)
    # MXU matmul, 8x smaller x tile, ~1.6x less HBM traffic).  Do NOT add a
    # wrapper-side transpose/cast -- it would cost an extra full HBM pass.

    p_block = pack_params(params)

    vmem_cap = _vmem_capacity_bytes()
    small_vmem = vmem_cap <= 64 * 2**20          # v7x-class: 64 MiB / TensorCore
    if tile_max is None:
        # x tile pads (tb, 9) -> (tb, 128): tb*512 B per buffer, x2 for double
        # buffering, + tb*64 B for the out buffers => ~1.1 KiB per row.
        tile_max = 20480 if small_vmem else 32768   # ~22 MiB vs ~36 MiB footprint

    if B <= tile_max:
        tb = B                                   # one step; blocks == full arrays
    else:
        # Adaptive tile: keep zero-padding small regardless of B.  tb must be a
        # multiple of 128 whenever grid > 1 (lane dim of the (2, tb) out block);
        # 128 | tb also gives 8 | tb for the x block's sublane dim.
        num_tiles = pl.cdiv(B, tile_max)
        if small_vmem and num_tiles > 1 and num_tiles % 2 == 1:
            num_tiles += 1                       # even split across v7x's 2 cores
        tb = _round_up(pl.cdiv(B, num_tiles), 128)
    grid_steps = pl.cdiv(B, tb)

    # Explicit VMEM budget (double-buffered x + out tiles, packed params, slack).
    vmem_needed = 2 * tb * 512 + 2 * tb * 32 + 2 * 8 * 128 * 4 + (4 << 20)
    vmem_limit = int(min(max(vmem_needed, 16 << 20), 0.8 * vmem_cap))

    cost = pl.CostEstimate(
        flops=2 * B * (9 * 5 + 5 * 3 + 3 * 2),
        transcendentals=5 * B,                    # 3 tanh + 1 exp + 1 log per row
        bytes_accessed=B * (9 + 2) * 4 + 8 * 128 * 4,
    )

    out_cm = pl.pallas_call(
        classifier_kernel,
        out_shape=jax.ShapeDtypeStruct((2, B), jnp.float32),
        grid=(grid_steps,),
        in_specs=[
            pl.BlockSpec((tb, 9), lambda i: (i, 0)),        # streamed batch tiles
            pl.BlockSpec((8, 128), lambda i: (0, 0)),       # packed params, resident
        ],
        out_specs=pl.BlockSpec((2, tb), lambda i: (0, i)),  # lane-dense stores
        compiler_params=pltpu.CompilerParams(
            dimension_semantics=("parallel",),              # shard tiles over TCs
            vmem_limit_bytes=vmem_limit,
        ),
        cost_estimate=cost,
    )(x2d, p_block)

    if class_major:
        return out_cm                      # (2, B): no extra transpose pass
    return out_cm.T                        # (B, 2): matches the PyTorch module


def init_params(key):
    """nn.Linear-default init: U(-1/sqrt(fan_in), 1/sqrt(fan_in)) for w and b."""
    shapes = [((5, 9), (5,)), ((3, 5), (3,)), ((2, 3), (2,))]
    params = []
    for (w_shape, b_shape) in shapes:
        key, kw, kb = jax.random.split(key, 3)
        bound = 1.0 / float(w_shape[1]) ** 0.5
        params.append(jax.random.uniform(kw, w_shape, jnp.float32, -bound, bound))
        params.append(jax.random.uniform(kb, b_shape, jnp.float32, -bound, bound))
    return tuple(params)


def reference_forward(x, params):
    """Pure-JAX reference mirroring the PyTorch forward (eval mode)."""
    w1, b1, w2, b2, w3, b3 = params
    h = x.reshape(x.shape[0], -1).astype(jnp.float32)
    h = jnp.maximum(h @ w1.T + b1, 0.0)
    h = jnp.tanh(h @ w2.T + b2)
    logits = h @ w3.T + b3
    return jax.nn.log_softmax(logits, axis=1)


if __name__ == "__main__":
    key = jax.random.PRNGKey(0)
    key, kx1, kx2 = jax.random.split(key, 3)
    params = init_params(key)

    # Small batch matching the module: 1x3x3 "images" -> 9 features after flatten.
    x_small = jax.random.normal(kx1, (8, 1, 3, 3), dtype=jnp.float32)
    out_small = jax.block_until_ready(classifier_forward(x_small, params))
    ref_small = reference_forward(x_small, params)
    assert out_small.shape == (8, 2)
    assert jnp.allclose(out_small, ref_small, atol=1e-5, rtol=1e-5), \
        "small-batch mismatch vs pure-JAX reference"

    # Multi-step grid + partial final tile (B=300, tb=128 -> 3 steps, 84 OOB rows).
    x_med = jax.random.normal(kx2, (300, 9), dtype=jnp.float32)
    out_med = jax.block_until_ready(
        classifier_forward(x_med, params, tile_max=128))
    ref_med = reference_forward(x_med, params)
    assert out_med.shape == (300, 2)
    assert jnp.allclose(out_med, ref_med, atol=1e-5, rtol=1e-5), \
        "multi-step mismatch vs pure-JAX reference"

    # Class-major output path (skips the wrapper transpose pass).
    out_cm = jax.block_until_ready(
        classifier_forward(x_med, params, class_major=True, tile_max=128))
    assert out_cm.shape == (2, 300)
    assert jnp.allclose(out_cm.T, ref_med, atol=1e-5, rtol=1e-5), \
        "class-major mismatch vs pure-JAX reference"

    print("KERNEL_OK")
</pallas_src>

<mosaic_0001>
module attributes {stable_mosaic.version = 11 : i64} {
  func.func @classifier_kernel(%arg0: i32, %arg1: memref<8x9xf32, #tpu.memory_space<vmem>>, %arg2: memref<8x128xf32, #tpu.memory_space<vmem>>, %arg3: memref<2x8xf32, #tpu.memory_space<vmem>>) attributes {dimension_semantics = [#tpu.dimension_semantics<parallel>], iteration_bounds = array<i64: 1>, scalar_prefetch = 0 : i64, scratch_operands = 0 : i64, tpu.core_type = #tpu.core_type<tc>, window_params = [{transform_indices = @transform_0, window_bounds = array<i64: 8, 9>}, {pipeline_mode = #tpu.pipeline_mode<synchronous>, transform_indices = @transform_1, window_bounds = array<i64: 8, 128>}, {transform_indices = @transform_2, window_bounds = array<i64: 2, 8>}]} {
    %c0 = arith.constant 0 : index
    %c0_0 = arith.constant 0 : index
    %0 = vector.load %arg2[%c0, %c0_0] : memref<8x128xf32, #tpu.memory_space<vmem>>, vector<8x128xf32>
    %1 = vector.extract_strided_slice %0 {offsets = [0, 0], sizes = [5, 9], strides = [1, 1]} : vector<8x128xf32> to vector<5x9xf32>
    %2 = vector.extract_strided_slice %0 {offsets = [0, 16], sizes = [5, 1], strides = [1, 1]} : vector<8x128xf32> to vector<5x1xf32>
    %3 = vector.extract_strided_slice %0 {offsets = [0, 32], sizes = [3, 5], strides = [1, 1]} : vector<8x128xf32> to vector<3x5xf32>
    %4 = vector.extract_strided_slice %0 {offsets = [0, 48], sizes = [3, 1], strides = [1, 1]} : vector<8x128xf32> to vector<3x1xf32>
    %5 = vector.extract_strided_slice %0 {offsets = [0, 64], sizes = [2, 3], strides = [1, 1]} : vector<8x128xf32> to vector<2x3xf32>
    %6 = vector.extract_strided_slice %0 {offsets = [0, 80], sizes = [2, 1], strides = [1, 1]} : vector<8x128xf32> to vector<2x1xf32>
    %c0_1 = arith.constant 0 : index
    %c0_2 = arith.constant 0 : index
    %7 = vector.load %arg1[%c0_1, %c0_2] : memref<8x9xf32, #tpu.memory_space<vmem>>, vector<8x9xf32>
    %cst = arith.constant dense<0.000000e+00> : vector<5x8xf32>
    %8 = tpu.matmul %1, %7, %cst {dimension_numbers = #tpu.dot_dimension_numbers<[1], [1], [0], [0], [0, 0, 1, 0], [], []>} : vector<5x9xf32>, vector<8x9xf32>, vector<5x8xf32> -> vector<5x8xf32>
    %9 = vector.broadcast %2 : vector<5x1xf32> to vector<5x8xf32>
    %10 = arith.addf %8, %9 : vector<5x8xf32>
    %cst_3 = arith.constant 0.000000e+00 : f32
    %11 = vector.broadcast %cst_3 : f32 to vector<5x8xf32>
    %12 = arith.maximumf %10, %11 : vector<5x8xf32>
    %cst_4 = arith.constant dense<0.000000e+00> : vector<3x8xf32>
    %13 = tpu.matmul %3, %12, %cst_4 {dimension_numbers = #tpu.dot_dimension_numbers<[1], [0], [0], [1], [0, 0, 1, 1], [], []>} : vector<3x5xf32>, vector<5x8xf32>, vector<3x8xf32> -> vector<3x8xf32>
    %14 = vector.broadcast %4 : vector<3x1xf32> to vector<3x8xf32>
    %15 = arith.addf %13, %14 : vector<3x8xf32>
    %16 = math.tanh %15 : vector<3x8xf32>
    %cst_5 = arith.constant dense<0.000000e+00> : vector<2x8xf32>
    %17 = tpu.matmul %5, %16, %cst_5 {dimension_numbers = #tpu.dot_dimension_numbers<[1], [0], [0], [1], [0, 0, 1, 1], [], []>} : vector<2x3xf32>, vector<3x8xf32>, vector<2x8xf32> -> vector<2x8xf32>
    %18 = vector.broadcast %6 : vector<2x1xf32> to vector<2x8xf32>
    %19 = arith.addf %17, %18 : vector<2x8xf32>
    %20 = vector.extract_strided_slice %19 {offsets = [0, 0], sizes = [1, 8], strides = [1, 1]} : vector<2x8xf32> to vector<1x8xf32>
    %21 = vector.extract_strided_slice %19 {offsets = [1, 0], sizes = [1, 8], strides = [1, 1]} : vector<2x8xf32> to vector<1x8xf32>
    %22 = arith.maximumf %20, %21 : vector<1x8xf32>
    %23 = arith.subf %20, %21 : vector<1x8xf32>
    %24 = math.absf %23 : vector<1x8xf32>
    %cst_6 = arith.constant 0.000000e+00 : f32
    %25 = vector.broadcast %cst_6 : f32 to vector<1x8xf32>
    %26 = arith.subf %25, %24 : vector<1x8xf32>
    %27 = math.exp %26 : vector<1x8xf32>
    %cst_7 = arith.constant 1.000000e+00 : f32
    %28 = vector.broadcast %cst_7 : f32 to vector<1x8xf32>
    %29 = arith.addf %28, %27 : vector<1x8xf32>
    %30 = math.log %29 : vector<1x8xf32>
    %31 = arith.addf %22, %30 : vector<1x8xf32>
    %32 = vector.broadcast %31 : vector<1x8xf32> to vector<2x8xf32>
    %33 = arith.subf %19, %32 : vector<2x8xf32>
    %c0_8 = arith.constant 0 : index
    %c0_9 = arith.constant 0 : index
    %34 = vector.load %arg3[%c0_8, %c0_9] : memref<2x8xf32, #tpu.memory_space<vmem>>, vector<2x8xf32>
    tpu.vector_store %arg3[%c0_8, %c0_9], %33 {strides = array<i32>} : memref<2x8xf32, #tpu.memory_space<vmem>>, vector<2x8xf32>,
    return
  }
  func.func @transform_0(%arg0: i32) -> (i32, i32) {
    %c0_i32 = arith.constant 0 : i32
    %c0_i32_0 = arith.constant 0 : i32
    return %arg0, %c0_i32 : i32, i32
  }
  func.func @transform_1(%arg0: i32) -> (i32, i32) {
    %c0_i32 = arith.constant 0 : i32
    %c0_i32_0 = arith.constant 0 : i32
    %c0_i32_1 = arith.constant 0 : i32
    return %c0_i32, %c0_i32_0 : i32, i32
  }
  func.func @transform_2(%arg0: i32) -> (i32, i32) {
    %c0_i32 = arith.constant 0 : i32
    %c0_i32_0 = arith.constant 0 : i32
    return %c0_i32, %arg0 : i32, i32
  }
}

</mosaic_0001>

<llo_original>
// kernel: tpu_custom_call.1
$region0: #{tpu_custom_call.1}
  #allocation0 [shape = 'u32[]', space=smem, size = 0x4, offset = 0x4, fixed_abs, tag = 'smem constant byte address 0x4 - core index']
  #allocation1 [shape = 'u32[144,128]{1,0:T(1,128)}', space=vmem, size = 0x12000, scoped, tag = 'internal scratch']
  %s0 = inlined_call_operand.hbm [shape: f32[8,9], index: 0, kind: input, shape index: {}]
  %s1 = inlined_call_operand.hbm [shape: f32[8,128], index: 1, kind: input, shape index: {}]
  %s2 = inlined_call_operand.hbm [shape: f32[2,8], index: 2, kind: output, shape index: {}]
  %s3 = sld [smem:[#allocation0]]
  $region26: #{tpu_custom_call.1} parent=0
    _
  %s5 = ssub.s32 1, %s3
  %s6 = scalar_select 0, %s5, %s3
  $region1: #{tpu_custom_call.1} parent=0
    #allocation2 [shape = 'u8[4096]{0}', space=vmem, size = 0x1000, scoped, tag = 'input window, operand 0, single buffered']
    #allocation3 [shape = 's32[1]{0}', space=sflag, size = 0x4, scoped, tag = 'scoped memory for tpu_custom_call.1']
    #allocation4 [shape = 's32[1]{0}', space=sflag, size = 0x4, scoped, tag = 'scoped memory for tpu_custom_call.1']
    #allocation5 [shape = 'u8[4096]{0}', space=vmem, size = 0x1000, scoped, tag = 'input window, operand 1, single buffered']
    #allocation6 [shape = 's32[1]{0}', space=sflag, size = 0x4, scoped, tag = 'scoped memory for tpu_custom_call.1']
    #allocation7 [shape = 'u8[1024]{0}', space=vmem, size = 0x400, scoped, tag = 'output window, operand 0, single buffered']
    %7 = vsyncpa [#allocation3], 0
    %8 = vsyncpa [#allocation6], 0
    %9 = vsyncpa [#allocation4], 0
    // Predicated region
    $region2: #{tpu_custom_call.1} parent=1 // pred_check
      _
    $region3: #{tpu_custom_call.1} parent=1 // pred_check_branch
      %11 = sbr.rel (0) target = $region5
    $region4: #{tpu_custom_call.1} parent=1 // pred_region
      %s13 = ssub.s32 128, 128
      %14 = vsyncadd [#allocation3], %s13
      %s16 = sshll.u32 [#allocation2], 4
      %s17 = int_to_ptr.vmem [resolvable:$true] %s16
      %19 = dma.hbm_to_vmem [thread:$0]  %s0, 128, %s17, [#allocation3]
    $region5: #{tpu_custom_call.1} parent=1 // pred_fallthru
      _
    // Predicated region
    $region6: #{tpu_custom_call.1} parent=1 // pred_check
      _
    $region7: #{tpu_custom_call.1} parent=1 // pred_check_branch
      %21 = sbr.rel (0) target = $region9
    $region8: #{tpu_custom_call.1} parent=1 // pred_region
      %s23 = ssub.s32 128, 128
      %24 = vsyncadd [#allocation6], %s23
      %s26 = sshll.u32 [#allocation5], 4
      %s27 = int_to_ptr.vmem [resolvable:$true] %s26
      %29 = dma.hbm_to_vmem [thread:$0]  %s1, 128, %s27, [#allocation6]
    $region9: #{tpu_custom_call.1} parent=1 // pred_fallthru
      _
    // Predicated region
    $region10: #{tpu_custom_call.1} parent=1 // pred_check
      _
    $region11: #{tpu_custom_call.1} parent=1 // pred_check_branch
      %31 = sbr.rel (0) target = $region13
    $region12: #{tpu_custom_call.1} parent=1 // pred_region
      %32 = dma.done [#allocation3], 128
    $region13: #{tpu_custom_call.1} parent=1 // pred_fallthru
      _
    // Predicated region
    $region14: #{tpu_custom_call.1} parent=1 // pred_check
      _
    $region15: #{tpu_custom_call.1} parent=1 // pred_check_branch
      %34 = sbr.rel (0) target = $region17
    $region16: #{tpu_custom_call.1} parent=1 // pred_region
      %35 = dma.done [#allocation6], 128
    $region17: #{tpu_custom_call.1} parent=1 // pred_fallthru
      _
    %v36 = vld [vmem:[#allocation5] sm:$0xff]
    %v37 = vld [vmem:[#allocation2] sm:$0xff]
    %39 = vset.pattern.permute.xlu0 16
    %40 = vperm.xlu0 %39, %v36
    %v41 = vpop.permute.xlu0 %40
    %vm43 = vcmask 72704
    %v44 = vsel %vm43, %v36, 0
    %v47 = vsel %vm43, %v37, 0
    %49 = vmatprep.subr.mxu0 0.0
    %50 = vmatpush1.xpose.msra.mxu0 0.0
    %51 = vmatprep.subr.mxu0 0.0
    %52 = vmatpush1.xpose.msra.mxu0 0.0
    %53 = vmatprep.subr.mxu0 0.0
    %54 = vmatpush1.xpose.msra.mxu0 0.0
    %55 = vmatprep.subr.mxu0 0.0
    %56 = vmatpush1.xpose.msra.mxu0 0.0
    %57 = vmatprep.subr.mxu0 0.0
    %58 = vmatpush1.xpose.msra.mxu0 0.0
    %59 = vmatprep.subr.mxu0 0.0
    %60 = vmatpush1.xpose.msra.mxu0 0.0
    %61 = vmatprep.subr.mxu0 0.0
    %62 = vmatpush1.xpose.msra.mxu0 0.0
    %63 = vmatprep.subr.mxu0 0.0
    %64 = vmatpush1.xpose.msra.mxu0 0.0
    %65 = vmatprep.subr.mxu0 0.0
    %66 = vmatpush1.xpose.msra.mxu0 0.0
    %67 = vmatprep.subr.mxu0 0.0
    %68 = vmatpush1.xpose.msra.mxu0 0.0
    %69 = vmatprep.subr.mxu0 0.0
    %70 = vmatpush1.xpose.msra.mxu0 0.0
    %71 = vmatprep.subr.mxu0 0.0
    %72 = vmatpush1.xpose.msra.mxu0 0.0
    %73 = vmatprep.subr.mxu0 0.0
    %74 = vmatpush1.xpose.msra.mxu0 0.0
    %75 = vmatprep.subr.mxu0 0.0
    %76 = vmatpush1.xpose.msra.mxu0 0.0
    %77 = vmatprep.subr.mxu0 0.0
    %78 = vmatpush1.xpose.msra.mxu0 0.0
    %79 = vmatprep.subr.mxu0 0.0
    %80 = vmatpush1.xpose.msra.mxu0 %v47
    %81 = vmatprep.subr.mxu0 0.0
    %82 = vmatpush2.xpose.msra.mxu0 0.0
    %83 = vmatprep.subr.mxu0 0.0
    %84 = vmatpush2.xpose.msra.mxu0 0.0
    %85 = vmatprep.subr.mxu0 0.0
    %86 = vmatpush2.xpose.msra.mxu0 0.0
    %87 = vmatprep.subr.mxu0 0.0
    %88 = vmatpush2.xpose.msra.mxu0 0.0
    %89 = vmatprep.subr.mxu0 0.0
    %90 = vmatpush2.xpose.msra.mxu0 0.0
    %91 = vmatprep.subr.mxu0 0.0
    %92 = vmatpush2.xpose.msra.mxu0 0.0
    %93 = vmatprep.subr.mxu0 0.0
    %94 = vmatpush2.xpose.msra.mxu0 0.0
    %95 = vmatprep.subr.mxu0 0.0
    %96 = vmatpush2.xpose.msra.mxu0 0.0
    %97 = vmatprep.subr.mxu0 0.0
    %98 = vmatpush2.xpose.msra.mxu0 0.0
    %99 = vmatprep.subr.mxu0 0.0
    %100 = vmatpush2.xpose.msra.mxu0 0.0
    %101 = vmatprep.subr.mxu0 0.0
    %102 = vmatpush2.xpose.msra.mxu0 0.0
    %103 = vmatprep.subr.mxu0 0.0
    %104 = vmatpush2.xpose.msra.mxu0 0.0
    %105 = vmatprep.subr.mxu0 0.0
    %106 = vmatpush2.xpose.msra.mxu0 0.0
    %107 = vmatprep.subr.mxu0 0.0
    %108 = vmatpush2.xpose.msra.mxu0 0.0
    %109 = vmatprep.subr.mxu0 0.0
    %110 = vmatpush2.xpose.msra.mxu0 0.0
    %111 = vmatprep.subr.mxu0 0.0
    %112 = vmatpush2.xpose.msra.mxu0 0.0
    %113 = vmatprep.mubr.f32.mxu0 0.0
    %114 = vmatmul.mubr.f32.gmra.mxu0 %v44
    %v115 = vpop.f32.mrf.mxu0
    %v116 = vadd.f32 %v41, %v115
    %v117 = vpop.f32.mrf.mxu0
    %118 = vdwg.mxu0
    %v119 = vmax.f32 %v116, 0.0
    %120 = vset.pattern.permute.xlu0 48
    %121 = vperm.xlu0 %120, %v36
    %v122 = vpop.permute.xlu0 %121
    %124 = vrot.lane.b32.xlu0 %v36, 96
    %v125 = vpop.permute.xlu0 %124
    %vm126 = vcmask 39936
    %v127 = vsel %vm126, %v125, 0
    %vm129 = vcmask 1044480
    %v131 = vsel %vm129, %v119, 0
    %133 = vmatprep.subr.mxu0 0.0
    %134 = vmatpush1.msra.mxu0 0.0
    %135 = vmatprep.subr.mxu0 0.0
    %136 = vmatpush1.msra.mxu0 0.0
    %137 = vmatprep.subr.mxu0 0.0
    %138 = vmatpush1.msra.mxu0 0.0
    %139 = vmatprep.subr.mxu0 0.0
    %140 = vmatpush1.msra.mxu0 0.0
    %141 = vmatprep.subr.mxu0 0.0
    %142 = vmatpush1.msra.mxu0 0.0
    %143 = vmatprep.subr.mxu0 0.0
    %144 = vmatpush1.msra.mxu0 0.0
    %145 = vmatprep.subr.mxu0 0.0
    %146 = vmatpush1.msra.mxu0 0.0
    %147 = vmatprep.subr.mxu0 0.0
    %148 = vmatpush1.msra.mxu0 0.0
    %149 = vmatprep.subr.mxu0 0.0
    %150 = vmatpush1.msra.mxu0 0.0
    %151 = vmatprep.subr.mxu0 0.0
    %152 = vmatpush1.msra.mxu0 0.0
    %153 = vmatprep.subr.mxu0 0.0
    %154 = vmatpush1.msra.mxu0 0.0
    %155 = vmatprep.subr.mxu0 0.0
    %156 = vmatpush1.msra.mxu0 0.0
    %157 = vmatprep.subr.mxu0 0.0
    %158 = vmatpush1.msra.mxu0 0.0
    %159 = vmatprep.subr.mxu0 0.0
    %160 = vmatpush1.msra.mxu0 0.0
    %161 = vmatprep.subr.mxu0 0.0
    %162 = vmatpush1.msra.mxu0 0.0
    %163 = vmatprep.subr.mxu0 0.0
    %164 = vmatpush1.msra.mxu0 %v131
    %165 = vmatprep.subr.mxu0 0.0
    %166 = vmatpush2.msra.mxu0 0.0
    %167 = vmatprep.subr.mxu0 0.0
    %168 = vmatpush2.msra.mxu0 0.0
    %169 = vmatprep.subr.mxu0 0.0
    %170 = vmatpush2.msra.mxu0 0.0
    %171 = vmatprep.subr.mxu0 0.0
    %172 = vmatpush2.msra.mxu0 0.0
    %173 = vmatprep.subr.mxu0 0.0
    %174 = vmatpush2.msra.mxu0 0.0
    %175 = vmatprep.subr.mxu0 0.0
    %176 = vmatpush2.msra.mxu0 0.0
    %177 = vmatprep.subr.mxu0 0.0
    %178 = vmatpush2.msra.mxu0 0.0
    %179 = vmatprep.subr.mxu0 0.0
    %180 = vmatpush2.msra.mxu0 0.0
    %181 = vmatprep.subr.mxu0 0.0
    %182 = vmatpush2.msra.mxu0 0.0
    %183 = vmatprep.subr.mxu0 0.0
    %184 = vmatpush2.msra.mxu0 0.0
    %185 = vmatprep.subr.mxu0 0.0
    %186 = vmatpush2.msra.mxu0 0.0
    %187 = vmatprep.subr.mxu0 0.0
    %188 = vmatpush2.msra.mxu0 0.0
    %189 = vmatprep.subr.mxu0 0.0
    %190 = vmatpush2.msra.mxu0 0.0
    %191 = vmatprep.subr.mxu0 0.0
    %192 = vmatpush2.msra.mxu0 0.0
    %193 = vmatprep.subr.mxu0 0.0
    %194 = vmatpush2.msra.mxu0 0.0
    %195 = vmatprep.subr.mxu0 0.0
    %196 = vmatpush2.msra.mxu0 0.0
    %197 = vmatprep.mubr.f32.mxu0 0.0
    %198 = vmatmul.mubr.f32.gmra.mxu0 %v127
    %v199 = vpop.f32.mrf.mxu0
    %v200 = vadd.f32 %v122, %v199
    %v201 = vpop.f32.mrf.mxu0
    %202 = vdwg.mxu0
    %v203 = vtanh.pop %v200
    %204 = vset.pattern.permute.xlu0 80
    %205 = vperm.xlu0 %204, %v36
    %v206 = vpop.permute.xlu0 %205
    %208 = vrot.lane.b32.xlu0 %v36, 64
    %v209 = vpop.permute.xlu0 %208
    %vm210 = vcmask 23552
    %v211 = vsel %vm210, %v209, 0
    %vm213 = vcmask 1042432
    %v215 = vsel %vm213, %v203, 0
    %217 = vmatprep.subr.mxu0 0.0
    %218 = vmatpush1.msra.mxu0 0.0
    %219 = vmatprep.subr.mxu0 0.0
    %220 = vmatpush1.msra.mxu0 0.0
    %221 = vmatprep.subr.mxu0 0.0
    %222 = vmatpush1.msra.mxu0 0.0
    %223 = vmatprep.subr.mxu0 0.0
    %224 = vmatpush1.msra.mxu0 0.0
    %225 = vmatprep.subr.mxu0 0.0
    %226 = vmatpush1.msra.mxu0 0.0
    %227 = vmatprep.subr.mxu0 0.0
    %228 = vmatpush1.msra.mxu0 0.0
    %229 = vmatprep.subr.mxu0 0.0
    %230 = vmatpush1.msra.mxu0 0.0
    %231 = vmatprep.subr.mxu0 0.0
    %232 = vmatpush1.msra.mxu0 0.0
    %233 = vmatprep.subr.mxu0 0.0
    %234 = vmatpush1.msra.mxu0 0.0
    %235 = vmatprep.subr.mxu0 0.0
    %236 = vmatpush1.msra.mxu0 0.0
    %237 = vmatprep.subr.mxu0 0.0
    %238 = vmatpush1.msra.mxu0 0.0
    %239 = vmatprep.subr.mxu0 0.0
    %240 = vmatpush1.msra.mxu0 0.0
    %241 = vmatprep.subr.mxu0 0.0
    %242 = vmatpush1.msra.mxu0 0.0
    %243 = vmatprep.subr.mxu0 0.0
    %244 = vmatpush1.msra.mxu0 0.0
    %245 = vmatprep.subr.mxu0 0.0
    %246 = vmatpush1.msra.mxu0 0.0
    %247 = vmatprep.subr.mxu0 0.0
    %248 = vmatpush1.msra.mxu0 %v215
    %249 = vmatprep.subr.mxu0 0.0
    %250 = vmatpush2.msra.mxu0 0.0
    %251 = vmatprep.subr.mxu0 0.0
    %252 = vmatpush2.msra.mxu0 0.0
    %253 = vmatprep.subr.mxu0 0.0
    %254 = vmatpush2.msra.mxu0 0.0
    %255 = vmatprep.subr.mxu0 0.0
    %256 = vmatpush2.msra.mxu0 0.0
    %257 = vmatprep.subr.mxu0 0.0
    %258 = vmatpush2.msra.mxu0 0.0
    %259 = vmatprep.subr.mxu0 0.0
    %260 = vmatpush2.msra.mxu0 0.0
    %261 = vmatprep.subr.mxu0 0.0
    %262 = vmatpush2.msra.mxu0 0.0
    %263 = vmatprep.subr.mxu0 0.0
    %264 = vmatpush2.msra.mxu0 0.0
    %265 = vmatprep.subr.mxu0 0.0
    %266 = vmatpush2.msra.mxu0 0.0
    %267 = vmatprep.subr.mxu0 0.0
    %268 = vmatpush2.msra.mxu0 0.0
    %269 = vmatprep.subr.mxu0 0.0
    %270 = vmatpush2.msra.mxu0 0.0
    %271 = vmatprep.subr.mxu0 0.0
    %272 = vmatpush2.msra.mxu0 0.0
    %273 = vmatprep.subr.mxu0 0.0
    %274 = vmatpush2.msra.mxu0 0.0
    %275 = vmatprep.subr.mxu0 0.0
    %276 = vmatpush2.msra.mxu0 0.0
    %277 = vmatprep.subr.mxu0 0.0
    %278 = vmatpush2.msra.mxu0 0.0
    %279 = vmatprep.subr.mxu0 0.0
    %280 = vmatpush2.msra.mxu0 0.0
    %281 = vmatprep.mubr.f32.mxu0 0.0
    %282 = vmatmul.mubr.f32.gmra.mxu0 %v211
    %v283 = vpop.f32.mrf.mxu0
    %v284 = vadd.f32 %v206, %v283
    %v285 = vpop.f32.mrf.mxu0
    %286 = vdwg.mxu0
    %v288 = vrot.slane %v284, 1
    %v290 = vmax.f32 %v284, %v288
    %v291 = vsub.f32 %v284, %v288
    %v292 = vand.u32 2147483647, %v291
    %v293 = vsub.f32 0.0, %v292
    %v294 = vmul.f32 %v293, 1.442695
    %v295 = vpow.pop %v294
    %v296 = vadd.f32 %v295, 1.0
    %v297 = vlog2.pop %v296
    %v298 = vmul.f32 %v297, 0.6931472
    %v299 = vadd.f32 %v290, %v298
    %v300 = vlaneseq
    %v301 = vshrl.u32 %v300, 7
    %v302 = vsub.s32 0, %v301
    %v303 = vrot.slane %v299, %v302
    %v304 = vsub.f32 %v284, %v303
    %vm305 = vcmask 58368
    %306 = vst.msk [vmem:[#allocation7] sm:$0x3] %vm305, %v304
    // Predicated region
    $region18: #{tpu_custom_call.1} parent=1 // pred_check
      _
    $region19: #{tpu_custom_call.1} parent=1 // pred_check_branch
      %308 = sbr.rel (0) target = $region21
    $region20: #{tpu_custom_call.1} parent=1 // pred_region
      %s310 = ssub.s32 32, 32
      %311 = vsyncadd [#allocation4], %s310
      %s313 = sshll.u32 [#allocation7], 4
      %s314 = int_to_ptr.vmem [resolvable:$true] %s313
      %316 = dma.vmem_to_hbm [thread:$0]  %s314, 32, %s2, [#allocation4]
    $region21: #{tpu_custom_call.1} parent=1 // pred_fallthru
      _
    // Predicated region
    $region22: #{tpu_custom_call.1} parent=1 // pred_check
      _
    $region23: #{tpu_custom_call.1} parent=1 // pred_check_branch
      %318 = sbr.rel (0) target = $region25
    $region24: #{tpu_custom_call.1} parent=1 // pred_region
      %319 = dma.done [#allocation4], 32
    $region25: #{tpu_custom_call.1} parent=1 // pred_fallthru
      _
    %320 = vsyncpa [#allocation3], 1
    %321 = vsyncpa [#allocation6], 1
    %322 = vsyncpa [#allocation4], 1

</llo_original>
